<compile_context>
chip_gen: v5e
topology: v5e:2x2
jax: 0.10.0
libtpu: 0.0.40
codegen_flags: <defaults>
</compile_context>

<pallas_src>
import functools
import math

import jax
import jax.numpy as jnp
from jax import lax
from jax.experimental import pallas as pl
from jax.experimental.pallas import tpu as pltpu

EPS = 1e-5


@functools.lru_cache(maxsize=1)
def _vmem_limit_bytes():
    """Scoped-VMEM budget: ~3/4 of physical VMEM, capped at 100 MiB.

    -> ~96-100 MiB on v5e/v6e (128 MiB physical), ~48 MiB on v7x (64 MiB physical).
    Falls back to a conservative 48 MiB if the hardware query is unavailable.
    """
    cap = 64 * 1024 * 1024
    try:
        cap = int(pltpu.get_tpu_info().vmem_capacity_bytes)
    except Exception:
        pass
    return min(100 * 1024 * 1024, (cap * 3) // 4)


# ----------------------------- Pallas kernels -----------------------------

def _conv_kernel(x_ref, w_ref, b_ref, aff_ref, mask_ref, out_ref, stats_ref,
                 *, cin, cout, H, W, fuse_bn_relu):
    """Complex 3x3 conv as 3 accumulating bf16 MXU matmuls (one per vertical tap).

    x_ref    : (1, 2*cin, H*W)    UNPADDED activation (f32 or bf16); rows [:cin]=real, [cin:]=imag
    w_ref    : (3, 2*cout, 6*cin) bf16 block weight; axis0 = kh, cols = (kw, [real_in ; imag_in])
    b_ref    : (2*cout, 1)        f32 effective bias [br - bi ; br + bi]
    aff_ref  : (cin, 8)           previous-stage BN affine (only used if fuse_bn_relu)
    mask_ref : (2, H*W)           f32: row0 = not_left, row1 = not_right
    out_ref  : (1, 2*cout, H*W)   bf16 raw complex conv output (pre-BN)
    stats_ref: (1, 8, cout)       f32 per-image partial sums, rows =
                                  [sum_r, sum_i, sum_r^2, sum_i^2, sum_r*i, 0, 0, 0]
    """
    HW = H * W
    # All VPU elementwise work stays in f32 (v5e has no bf16 VALU); only matmul operands are bf16.
    x = x_ref[0].astype(jnp.float32)                     # (2*cin, HW)

    if fuse_bn_relu:
        # Fused previous-stage ComplexBatchNorm2d + ComplexReLU, applied BEFORE padding,
        # so the in-kernel zero padding below is exactly the conv's zero padding.
        a_rr = aff_ref[:, 0:1]
        a_ri = aff_ref[:, 1:2]
        a_ir = aff_ref[:, 2:3]
        a_ii = aff_ref[:, 3:4]
        c_r = aff_ref[:, 4:5]
        c_i = aff_ref[:, 5:6]
        xr = x[:cin]
        xi = x[cin:]
        yr = jnp.maximum(a_rr * xr + a_ri * xi + c_r, 0.0)
        yi = jnp.maximum(a_ir * xr + a_ii * xi + c_i, 0.0)
        x = jnp.concatenate([yr, yi], axis=0)

    # Conv zero padding done in VMEM (no HBM round trip through jnp.pad): W+1 zero lanes
    # before/after the flattened NCHW image cover the vertical (kh) taps.
    zpad = jnp.zeros((2 * cin, W + 1), jnp.float32)
    xp = jnp.concatenate([zpad, x, zpad], axis=1)        # (2*cin, (H+2)*W + 2)

    not_left = mask_ref[0:1, :]                          # kills wrap-around read at w == 0
    not_right = mask_ref[1:2, :]                         # kills wrap-around read at w == W-1

    # 3 accumulating matmuls, K = 6*cin each. Chunks are masked in f32 and cast to bf16
    # per chunk, so the full (9*2*cin, HW) patch matrix is never materialized.
    out = None
    for dh in range(3):
        chunks = []
        for dw in range(3):
            start = dh * W + dw
            c = xp[:, start:start + HW]                  # (2*cin, HW) f32
            if dw == 0:
                c = c * not_left
            elif dw == 2:
                c = c * not_right
            chunks.append(c.astype(jnp.bfloat16))
        p_dh = jnp.concatenate(chunks, axis=0)           # (6*cin, HW) bf16
        d = jnp.dot(w_ref[dh], p_dh, preferred_element_type=jnp.float32)
        out = d if out is None else out + d
    out = out + b_ref[...]                               # (2*cout, HW) f32

    out_bf = out.astype(jnp.bfloat16)
    out_ref[0] = out_bf                                  # bf16 store -> half the HBM write traffic

    # Batch-norm partial statistics via one small MXU Gram matmul (rides MXU slack) instead of
    # 3 full-width VPU multiplies + 5 cross-lane reduction trees:
    #   o_ext = [out ; ones],  G = o_ext @ o_ext^T  (lane-axis contraction, f32 accumulation)
    #   diag(G)[:cout] = sum r^2, diag(G)[cout:2c] = sum i^2, G[c+cout, c] = sum r*i,
    #   G[2c, :2c]     = [sum r | sum i]   (from the appended ones row; already lane-dense).
    ones_row = jnp.ones((1, HW), jnp.bfloat16)
    o_ext = jnp.concatenate([out_bf, ones_row], axis=0)  # (2*cout+1, HW)
    g = lax.dot_general(o_ext, o_ext,
                        dimension_numbers=(((1,), (1,)), ((), ())),
                        preferred_element_type=jnp.float32)     # (2c+1, 2c+1)
    n = 2 * cout + 1
    row_i = lax.broadcasted_iota(jnp.int32, (n, n), 0)
    col_i = lax.broadcasted_iota(jnp.int32, (n, n), 1)
    diag = jnp.sum(jnp.where(row_i == col_i, g, 0.0), axis=0, keepdims=True)         # (1, n)
    offd = jnp.sum(jnp.where(row_i == col_i + cout, g, 0.0), axis=0, keepdims=True)  # (1, n)
    sums = g[2 * cout:2 * cout + 1, :]                                               # (1, n)
    stats_ref[0] = jnp.concatenate([
        sums[:, :cout], sums[:, cout:2 * cout],          # sum_r, sum_i
        diag[:, :cout], diag[:, cout:2 * cout],          # sum_r^2, sum_i^2
        offd[:, :cout],                                  # sum_r*i
        jnp.zeros((3, cout), jnp.float32),
    ], axis=0)                                           # (8, cout) lane-dense store


def _bn_relu_kernel(x_ref, aff_ref, o_ref, *, cout):
    """Final complex BatchNorm (folded per-channel 2x2 affine + shift) + complex ReLU.

    aff columns: [a_rr, a_ri, a_ir, a_ii, c_r, c_i, 0, 0], one row per channel.
      y_r = relu(a_rr*x_r + a_ri*x_i + c_r)
      y_i = relu(a_ir*x_r + a_ii*x_i + c_i)
    """
    x = x_ref[0].astype(jnp.float32)                     # (2*cout, HW)
    xr = x[:cout]
    xi = x[cout:]
    a_rr = aff_ref[:, 0:1]
    a_ri = aff_ref[:, 1:2]
    a_ir = aff_ref[:, 2:3]
    a_ii = aff_ref[:, 3:4]
    c_r = aff_ref[:, 4:5]
    c_i = aff_ref[:, 5:6]
    yr = jnp.maximum(a_rr * xr + a_ri * xi + c_r, 0.0)
    yi = jnp.maximum(a_ir * xr + a_ii * xi + c_i, 0.0)
    o_ref[0] = jnp.concatenate([yr, yi], axis=0)


# ----------------------------- pallas_call wrappers -----------------------------

def _conv_call(x, wblk, bias, aff, masks, *, cin, cout, H, W, fuse):
    N = x.shape[0]
    HW = H * W
    kernel = functools.partial(_conv_kernel, cin=cin, cout=cout, H=H, W=W,
                               fuse_bn_relu=fuse)
    return pl.pallas_call(
        kernel,
        out_shape=(jax.ShapeDtypeStruct((N, 2 * cout, HW), jnp.bfloat16),
                   jax.ShapeDtypeStruct((N, 8, cout), jnp.float32)),
        grid_spec=pltpu.PrefetchScalarGridSpec(
            num_scalar_prefetch=0,
            grid=(N,),
            in_specs=[
                pl.BlockSpec((1, 2 * cin, HW), lambda n: (n, 0, 0)),
                pl.BlockSpec((3, 2 * cout, 6 * cin), lambda n: (0, 0, 0)),   # grid-invariant
                pl.BlockSpec((2 * cout, 1), lambda n: (0, 0)),
                pl.BlockSpec((cin, 8), lambda n: (0, 0)),
                pl.BlockSpec((2, HW), lambda n: (0, 0)),
            ],
            out_specs=[
                pl.BlockSpec((1, 2 * cout, HW), lambda n: (n, 0, 0)),
                pl.BlockSpec((1, 8, cout), lambda n: (n, 0, 0)),             # per-image partials
            ]),
        compiler_params=pltpu.CompilerParams(
            dimension_semantics=("parallel",),   # no cross-step accumulator -> megacore-shardable
            vmem_limit_bytes=_vmem_limit_bytes()),
    )(x, wblk, bias, aff, masks)


def _bn_relu_call(x, aff, *, cout):
    N, C2, HW = x.shape
    kernel = functools.partial(_bn_relu_kernel, cout=cout)
    return pl.pallas_call(
        kernel,
        out_shape=jax.ShapeDtypeStruct((N, C2, HW), jnp.float32),
        grid_spec=pltpu.PrefetchScalarGridSpec(
            num_scalar_prefetch=0,
            grid=(N,),
            in_specs=[pl.BlockSpec((1, C2, HW), lambda n: (n, 0, 0)),
                      pl.BlockSpec((cout, 8), lambda n: (0, 0))],
            out_specs=pl.BlockSpec((1, C2, HW), lambda n: (n, 0, 0))),
        compiler_params=pltpu.CompilerParams(
            dimension_semantics=("parallel",),
            vmem_limit_bytes=_vmem_limit_bytes()),
    )(x, aff)


# ----------------------------- glue -----------------------------

def _build_masks(H, W):
    """(2, H*W) f32: row0 = not_left (w>0), row1 = not_right (w<W-1) over the flattened image."""
    HW = H * W
    w_idx = jnp.arange(HW, dtype=jnp.int32) % W
    not_left = (w_idx > 0).astype(jnp.float32)
    not_right = (w_idx < W - 1).astype(jnp.float32)
    return jnp.stack([not_left, not_right], axis=0)


def _block_weight(wr, wi):
    """(3,3,Cin,Cout) HWIO real/imag weights -> (3, 2*Cout, 6*Cin) bf16 block weight.

    Axis 0 is the vertical tap kh. Within a kh block, column = kw*2*Cin + j with j indexing
    [real in-channels ; imag in-channels]; rows = [real out-channels ; imag out-channels].
    Per-kh block = [[Wr, -Wi], [Wi, Wr]] so each of the 3 matmuls yields a partial complex product.
    """
    cin, cout = wr.shape[2], wr.shape[3]
    wrT = jnp.transpose(wr.reshape(9, cin, cout), (0, 2, 1))   # (9, Cout, Cin)
    wiT = jnp.transpose(wi.reshape(9, cin, cout), (0, 2, 1))
    top = jnp.concatenate([wrT, -wiT], axis=2)                 # real-output rows
    bot = jnp.concatenate([wiT, wrT], axis=2)                  # imag-output rows
    blk = jnp.concatenate([top, bot], axis=1)                  # (9, 2*Cout, 2*Cin)
    blk = blk.reshape(3, 3, 2 * cout, 2 * cin)                 # (kh, kw, 2*Cout, 2*Cin)
    blk = jnp.transpose(blk, (0, 2, 1, 3)).reshape(3, 2 * cout, 6 * cin)
    return blk.astype(jnp.bfloat16)


def _block_bias(br, bi):
    """Effective complex-conv biases stacked as (2*Cout, 1): [br - bi ; br + bi]."""
    return jnp.concatenate([br - bi, br + bi]).reshape(-1, 1).astype(jnp.float32)


def _complex_bn_affine(stats_partial, count, g_rr, g_ii, g_ri, beta_r, beta_i, eps=EPS):
    """Reduce per-image partial stats (N, 8, Cout) and fold whitening complex-BN into (Cout, 8)."""
    s = jnp.sum(stats_partial, axis=0)             # (8, Cout)
    sum_r, sum_i = s[0], s[1]
    sum_rr, sum_ii, sum_ri = s[2], s[3], s[4]
    mr = sum_r / count
    mi = sum_i / count
    # Uncentered moments in f32; det floored to guard against cancellation-driven negatives.
    crr = sum_rr / count - mr * mr + eps
    cii = sum_ii / count - mi * mi + eps
    cri = sum_ri / count - mr * mi
    det = jnp.maximum(crr * cii - cri * cri, 1e-20)
    sdet = jnp.sqrt(det)
    t = jnp.sqrt(crr + cii + 2.0 * sdet)
    ist = 1.0 / (sdet * t)
    r_rr = (cii + sdet) * ist
    r_ii = (crr + sdet) * ist
    r_ri = -cri * ist
    a_rr = g_rr * r_rr + g_ri * r_ri
    a_ri = g_rr * r_ri + g_ri * r_ii
    a_ir = g_ri * r_rr + g_ii * r_ri
    a_ii = g_ri * r_ri + g_ii * r_ii
    c_r = beta_r - (a_rr * mr + a_ri * mi)
    c_i = beta_i - (a_ir * mr + a_ii * mi)
    zero = jnp.zeros_like(a_rr)
    return jnp.stack([a_rr, a_ri, a_ir, a_ii, c_r, c_i, zero, zero], axis=1)  # (Cout, 8)


def complex_double_conv(x_real_nchw, x_imag_nchw, p):
    """Forward of ComplexDoubleConv. Inputs / outputs are NCHW (real, imag) float32 pairs."""
    N, Cin, H, W = x_real_nchw.shape
    HW = H * W
    cout = p['w1r'].shape[-1]
    count = float(N * HW)
    masks = _build_masks(H, W)

    # stacked-channel layout (flattened NCHW): (N, 2*C, H*W), unpadded (padding happens in-kernel)
    x = jnp.concatenate([x_real_nchw.reshape(N, Cin, HW),
                         x_imag_nchw.reshape(N, Cin, HW)], axis=1)

    # ---- stage 1: ComplexConv2d (+ batch-stat partials) ----
    w1 = _block_weight(p['w1r'], p['w1i'])
    b1 = _block_bias(p['b1r'], p['b1i'])
    dummy_aff = jnp.zeros((Cin, 8), jnp.float32)   # unused (no fused input BN for stage 1)
    y1, st1 = _conv_call(x, w1, b1, dummy_aff, masks,
                         cin=Cin, cout=cout, H=H, W=W, fuse=False)
    aff1 = _complex_bn_affine(st1, count, p['g1_rr'], p['g1_ii'], p['g1_ri'],
                              p['bn1_r'], p['bn1_i'])

    # ---- stage 2: fused (BN1 + ReLU) -> ComplexConv2d (+ batch-stat partials) ----
    w2 = _block_weight(p['w2r'], p['w2i'])
    b2 = _block_bias(p['b2r'], p['b2i'])
    y2, st2 = _conv_call(y1, w2, b2, aff1, masks,
                         cin=cout, cout=cout, H=H, W=W, fuse=True)
    aff2 = _complex_bn_affine(st2, count, p['g2_rr'], p['g2_ii'], p['g2_ri'],
                              p['bn2_r'], p['bn2_i'])

    # ---- final BN2 + ReLU ----
    y = _bn_relu_call(y2, aff2, cout=cout)         # (N, 2*Cout, HW) f32
    yr = y[:, :cout, :].reshape(N, cout, H, W)     # already NCHW
    yi = y[:, cout:, :].reshape(N, cout, H, W)
    return yr, yi


# ----------------------------- pure-JAX reference (for checking) -----------------------------

def _reference_stage(xr, xi, wr, wi, br, bi, g_rr, g_ii, g_ri, beta_r, beta_i, eps=EPS):
    dn = ('NHWC', 'HWIO', 'NHWC')
    conv = lambda x, w: jax.lax.conv_general_dilated(
        x, w, (1, 1), 'SAME', dimension_numbers=dn, precision=jax.lax.Precision.HIGHEST)
    cr = conv(xr, wr) - conv(xi, wi) + (br - bi)
    ci = conv(xi, wr) + conv(xr, wi) + (br + bi)
    mr = cr.mean((0, 1, 2)); mi = ci.mean((0, 1, 2))
    dr = cr - mr; di = ci - mi
    crr = (dr * dr).mean((0, 1, 2)) + eps
    cii = (di * di).mean((0, 1, 2)) + eps
    cri = (dr * di).mean((0, 1, 2))
    det = crr * cii - cri * cri
    s = jnp.sqrt(det); t = jnp.sqrt(crr + cii + 2.0 * s); ist = 1.0 / (s * t)
    r_rr = (cii + s) * ist; r_ii = (crr + s) * ist; r_ri = -cri * ist
    xn_r = r_rr * dr + r_ri * di
    xn_i = r_ii * di + r_ri * dr
    yr = g_rr * xn_r + g_ri * xn_i + beta_r
    yi = g_ri * xn_r + g_ii * xn_i + beta_i
    return jnp.maximum(yr, 0.0), jnp.maximum(yi, 0.0)


def reference_double_conv(x_real_nchw, x_imag_nchw, p):
    xr = jnp.transpose(x_real_nchw, (0, 2, 3, 1))
    xi = jnp.transpose(x_imag_nchw, (0, 2, 3, 1))
    yr, yi = _reference_stage(xr, xi, p['w1r'], p['w1i'], p['b1r'], p['b1i'],
                              p['g1_rr'], p['g1_ii'], p['g1_ri'], p['bn1_r'], p['bn1_i'])
    yr, yi = _reference_stage(yr, yi, p['w2r'], p['w2i'], p['b2r'], p['b2i'],
                              p['g2_rr'], p['g2_ii'], p['g2_ri'], p['bn2_r'], p['bn2_i'])
    return jnp.transpose(yr, (0, 3, 1, 2)), jnp.transpose(yi, (0, 3, 1, 2))


# ----------------------------- deterministic parameter init -----------------------------

def init_params(key, cin, cout):
    ks = jax.random.split(key, 8)

    def w(k, ci, co):
        return jax.random.normal(k, (3, 3, ci, co), jnp.float32) / math.sqrt(9.0 * ci)

    def b(k, co):
        return jax.random.normal(k, (co,), jnp.float32) * 0.1

    p = {
        'w1r': w(ks[0], cin, cout), 'w1i': w(ks[1], cin, cout),
        'b1r': b(ks[2], cout),      'b1i': b(ks[3], cout),
        'w2r': w(ks[4], cout, cout), 'w2i': w(ks[5], cout, cout),
        'b2r': b(ks[6], cout),      'b2i': b(ks[7], cout),
    }
    inv_sqrt2 = 1.0 / math.sqrt(2.0)
    for s in ('1', '2'):
        p[f'g{s}_rr'] = jnp.full((cout,), inv_sqrt2, jnp.float32)
        p[f'g{s}_ii'] = jnp.full((cout,), inv_sqrt2, jnp.float32)
        p[f'g{s}_ri'] = jnp.zeros((cout,), jnp.float32)
        p[f'bn{s}_r'] = jnp.zeros((cout,), jnp.float32)
        p[f'bn{s}_i'] = jnp.zeros((cout,), jnp.float32)
    return p


# ----------------------------- main -----------------------------

if __name__ == "__main__":
    N, Cin, Cout, H, W = 2, 4, 8, 16, 16
    key = jax.random.PRNGKey(0)
    kxr, kxi, kp = jax.random.split(key, 3)

    # complex NCHW input, carried as (real, imag) float32 pair
    x_real = jax.random.normal(kxr, (N, Cin, H, W), jnp.float32)
    x_imag = jax.random.normal(kxi, (N, Cin, H, W), jnp.float32)
    params = init_params(kp, Cin, Cout)

    yr, yi = complex_double_conv(x_real, x_imag, params)
    (yr, yi) = jax.block_until_ready((yr, yi))

    # sanity-check against a pure-f32 JAX reference of the same math
    rr, ri = reference_double_conv(x_real, x_imag, params)
    err = max(float(jnp.max(jnp.abs(yr - rr))), float(jnp.max(jnp.abs(yi - ri))))
    assert yr.shape == (N, Cout, H, W) and yi.shape == (N, Cout, H, W)
    # kernel uses bf16 MXU operands and bf16 inter-stage activations (f32 accumulation);
    # reference is pure f32
    assert err < 5e-2, f"mismatch vs reference: {err}"

    print("KERNEL_OK")
</pallas_src>

<mosaic_0001>
module attributes {stable_mosaic.version = 11 : i64} {
  func.func @_conv_kernel(%arg0: i32, %arg1: memref<1x8x256xf32, #tpu.memory_space<vmem>>, %arg2: memref<3x16x24xbf16, #tpu.memory_space<vmem>>, %arg3: memref<16x1xf32, #tpu.memory_space<vmem>>, %arg4: memref<4x8xf32, #tpu.memory_space<vmem>>, %arg5: memref<2x256xf32, #tpu.memory_space<vmem>>, %arg6: memref<1x16x256xbf16, #tpu.memory_space<vmem>>, %arg7: memref<1x8x8xf32, #tpu.memory_space<vmem>>) attributes {dimension_semantics = [#tpu.dimension_semantics<parallel>], iteration_bounds = array<i64: 2>, scalar_prefetch = 0 : i64, scratch_operands = 0 : i64, tpu.core_type = #tpu.core_type<tc>, window_params = [{transform_indices = @transform_0, window_bounds = array<i64: 1, 8, 256>}, {pipeline_mode = #tpu.pipeline_mode<synchronous>, transform_indices = @transform_1, window_bounds = array<i64: 3, 16, 24>}, {pipeline_mode = #tpu.pipeline_mode<synchronous>, transform_indices = @transform_2, window_bounds = array<i64: 16, 1>}, {pipeline_mode = #tpu.pipeline_mode<synchronous>, transform_indices = @transform_3, window_bounds = array<i64: 4, 8>}, {pipeline_mode = #tpu.pipeline_mode<synchronous>, transform_indices = @transform_4, window_bounds = array<i64: 2, 256>}, {transform_indices = @transform_5, window_bounds = array<i64: 1, 16, 256>}, {transform_indices = @transform_6, window_bounds = array<i64: 1, 8, 8>}]} {
    %c0 = arith.constant 0 : index
    %c0_0 = arith.constant 0 : index
    %c0_1 = arith.constant 0 : index
    %0 = vector.load %arg1[%c0, %c0_0, %c0_1] : memref<1x8x256xf32, #tpu.memory_space<vmem>>, vector<1x8x256xf32>
    %1 = vector.shape_cast %0 : vector<1x8x256xf32> to vector<8x256xf32>
    %cst = arith.constant 0.000000e+00 : f32
    %2 = vector.broadcast %cst : f32 to vector<8x17xf32>
    %3 = tpu.concatenate %2, %1, %2 in 1 : vector<8x17xf32>, vector<8x256xf32>, vector<8x17xf32> -> vector<8x290xf32>
    %c0_2 = arith.constant 0 : index
    %c0_3 = arith.constant 0 : index
    %4 = vector.load %arg5[%c0_2, %c0_3] : memref<2x256xf32, #tpu.memory_space<vmem>>, vector<1x256xf32>
    %c1 = arith.constant 1 : index
    %c0_4 = arith.constant 0 : index
    %5 = vector.load %arg5[%c1, %c0_4] : memref<2x256xf32, #tpu.memory_space<vmem>>, vector<1x256xf32>
    %6 = vector.extract_strided_slice %3 {offsets = [0, 0], sizes = [8, 256], strides = [1, 1]} : vector<8x290xf32> to vector<8x256xf32>
    %7 = vector.broadcast %4 : vector<1x256xf32> to vector<8x256xf32>
    %8 = arith.mulf %6, %7 : vector<8x256xf32>
    %9 = arith.truncf %8 : vector<8x256xf32> to vector<8x256xbf16>
    %10 = vector.extract_strided_slice %3 {offsets = [0, 1], sizes = [8, 256], strides = [1, 1]} : vector<8x290xf32> to vector<8x256xf32>
    %11 = arith.truncf %10 : vector<8x256xf32> to vector<8x256xbf16>
    %12 = vector.extract_strided_slice %3 {offsets = [0, 2], sizes = [8, 256], strides = [1, 1]} : vector<8x290xf32> to vector<8x256xf32>
    %13 = vector.broadcast %5 : vector<1x256xf32> to vector<8x256xf32>
    %14 = arith.mulf %12, %13 : vector<8x256xf32>
    %15 = arith.truncf %14 : vector<8x256xf32> to vector<8x256xbf16>
    %16 = tpu.concatenate %9, %11, %15 in 0 : vector<8x256xbf16>, vector<8x256xbf16>, vector<8x256xbf16> -> vector<24x256xbf16>
    %c0_5 = arith.constant 0 : index
    %c0_6 = arith.constant 0 : index
    %c0_7 = arith.constant 0 : index
    %17 = vector.load %arg2[%c0_5, %c0_6, %c0_7] : memref<3x16x24xbf16, #tpu.memory_space<vmem>>, vector<1x16x24xbf16>
    %18 = vector.shape_cast %17 : vector<1x16x24xbf16> to vector<16x24xbf16>
    %cst_8 = arith.constant dense<0.000000e+00> : vector<16x256xf32>
    %19 = tpu.matmul %18, %16, %cst_8 {dimension_numbers = #tpu.dot_dimension_numbers<[1], [0], [0], [1], [0, 0, 1, 1], [], []>} : vector<16x24xbf16>, vector<24x256xbf16>, vector<16x256xf32> -> vector<16x256xf32>
    %20 = vector.extract_strided_slice %3 {offsets = [0, 16], sizes = [8, 256], strides = [1, 1]} : vector<8x290xf32> to vector<8x256xf32>
    %21 = vector.broadcast %4 : vector<1x256xf32> to vector<8x256xf32>
    %22 = arith.mulf %20, %21 : vector<8x256xf32>
    %23 = arith.truncf %22 : vector<8x256xf32> to vector<8x256xbf16>
    %24 = vector.extract_strided_slice %3 {offsets = [0, 17], sizes = [8, 256], strides = [1, 1]} : vector<8x290xf32> to vector<8x256xf32>
    %25 = arith.truncf %24 : vector<8x256xf32> to vector<8x256xbf16>
    %26 = vector.extract_strided_slice %3 {offsets = [0, 18], sizes = [8, 256], strides = [1, 1]} : vector<8x290xf32> to vector<8x256xf32>
    %27 = vector.broadcast %5 : vector<1x256xf32> to vector<8x256xf32>
    %28 = arith.mulf %26, %27 : vector<8x256xf32>
    %29 = arith.truncf %28 : vector<8x256xf32> to vector<8x256xbf16>
    %30 = tpu.concatenate %23, %25, %29 in 0 : vector<8x256xbf16>, vector<8x256xbf16>, vector<8x256xbf16> -> vector<24x256xbf16>
    %c1_9 = arith.constant 1 : index
    %c0_10 = arith.constant 0 : index
    %c0_11 = arith.constant 0 : index
    %31 = vector.load %arg2[%c1_9, %c0_10, %c0_11] : memref<3x16x24xbf16, #tpu.memory_space<vmem>>, vector<1x16x24xbf16>
    %32 = vector.shape_cast %31 : vector<1x16x24xbf16> to vector<16x24xbf16>
    %cst_12 = arith.constant dense<0.000000e+00> : vector<16x256xf32>
    %33 = tpu.matmul %32, %30, %cst_12 {dimension_numbers = #tpu.dot_dimension_numbers<[1], [0], [0], [1], [0, 0, 1, 1], [], []>} : vector<16x24xbf16>, vector<24x256xbf16>, vector<16x256xf32> -> vector<16x256xf32>
    %34 = arith.addf %19, %33 : vector<16x256xf32>
    %35 = vector.extract_strided_slice %3 {offsets = [0, 32], sizes = [8, 256], strides = [1, 1]} : vector<8x290xf32> to vector<8x256xf32>
    %36 = vector.broadcast %4 : vector<1x256xf32> to vector<8x256xf32>
    %37 = arith.mulf %35, %36 : vector<8x256xf32>
    %38 = arith.truncf %37 : vector<8x256xf32> to vector<8x256xbf16>
    %39 = vector.extract_strided_slice %3 {offsets = [0, 33], sizes = [8, 256], strides = [1, 1]} : vector<8x290xf32> to vector<8x256xf32>
    %40 = arith.truncf %39 : vector<8x256xf32> to vector<8x256xbf16>
    %41 = vector.extract_strided_slice %3 {offsets = [0, 34], sizes = [8, 256], strides = [1, 1]} : vector<8x290xf32> to vector<8x256xf32>
    %42 = vector.broadcast %5 : vector<1x256xf32> to vector<8x256xf32>
    %43 = arith.mulf %41, %42 : vector<8x256xf32>
    %44 = arith.truncf %43 : vector<8x256xf32> to vector<8x256xbf16>
    %45 = tpu.concatenate %38, %40, %44 in 0 : vector<8x256xbf16>, vector<8x256xbf16>, vector<8x256xbf16> -> vector<24x256xbf16>
    %c2 = arith.constant 2 : index
    %c0_13 = arith.constant 0 : index
    %c0_14 = arith.constant 0 : index
    %46 = vector.load %arg2[%c2, %c0_13, %c0_14] : memref<3x16x24xbf16, #tpu.memory_space<vmem>>, vector<1x16x24xbf16>
    %47 = vector.shape_cast %46 : vector<1x16x24xbf16> to vector<16x24xbf16>
    %cst_15 = arith.constant dense<0.000000e+00> : vector<16x256xf32>
    %48 = tpu.matmul %47, %45, %cst_15 {dimension_numbers = #tpu.dot_dimension_numbers<[1], [0], [0], [1], [0, 0, 1, 1], [], []>} : vector<16x24xbf16>, vector<24x256xbf16>, vector<16x256xf32> -> vector<16x256xf32>
    %49 = arith.addf %34, %48 : vector<16x256xf32>
    %c0_16 = arith.constant 0 : index
    %c0_17 = arith.constant 0 : index
    %50 = vector.load %arg3[%c0_16, %c0_17] : memref<16x1xf32, #tpu.memory_space<vmem>>, vector<16x1xf32>
    %51 = vector.broadcast %50 : vector<16x1xf32> to vector<16x256xf32>
    %52 = arith.addf %49, %51 : vector<16x256xf32>
    %53 = arith.truncf %52 : vector<16x256xf32> to vector<16x256xbf16>
    %c0_18 = arith.constant 0 : index
    %c0_19 = arith.constant 0 : index
    %c0_20 = arith.constant 0 : index
    %54 = vector.load %arg6[%c0_18, %c0_19, %c0_20] : memref<1x16x256xbf16, #tpu.memory_space<vmem>>, vector<1x16x256xbf16>
    %55 = vector.shape_cast %54 : vector<1x16x256xbf16> to vector<16x256xbf16>
    %56 = vector.shape_cast %53 : vector<16x256xbf16> to vector<1x16x256xbf16>
    tpu.vector_store %arg6[%c0_18, %c0_19, %c0_20], %56 {strides = array<i32>} : memref<1x16x256xbf16, #tpu.memory_space<vmem>>, vector<1x16x256xbf16>,
    %cst_21 = arith.constant 1.000000e+00 : bf16
    %57 = vector.broadcast %cst_21 : bf16 to vector<1x256xbf16>
    %58 = tpu.concatenate %53, %57 in 0 : vector<16x256xbf16>, vector<1x256xbf16> -> vector<17x256xbf16>
    %cst_22 = arith.constant dense<0.000000e+00> : vector<17x17xf32>
    %59 = tpu.matmul %58, %58, %cst_22 {dimension_numbers = #tpu.dot_dimension_numbers<[1], [1], [0], [0], [0, 0, 1, 0], [], []>} : vector<17x256xbf16>, vector<17x256xbf16>, vector<17x17xf32> -> vector<17x17xf32>
    %60 = tpu.iota {dimensions = array<i32: 0>} : vector<17x17xi32>
    %61 = tpu.iota {dimensions = array<i32: 1>} : vector<17x17xi32>
    %62 = arith.cmpi eq, %60, %61 : vector<17x17xi32>
    %cst_23 = arith.constant 0.000000e+00 : f32
    %63 = vector.broadcast %cst_23 : f32 to vector<17x17xf32>
    %64 = arith.select %62, %59, %63 : vector<17x17xi1>, vector<17x17xf32>
    %cst_24 = arith.constant dense<0.000000e+00> : vector<17xf32>
    %65 = vector.multi_reduction <add>, %64, %cst_24 [0] : vector<17x17xf32> to vector<17xf32>
    %66 = vector.shape_cast %65 : vector<17xf32> to vector<1x17xf32>
    %c8_i32 = arith.constant 8 : i32
    %67 = vector.broadcast %c8_i32 : i32 to vector<17x17xi32>
    %68 = arith.addi %61, %67 : vector<17x17xi32>
    %69 = arith.cmpi eq, %60, %68 : vector<17x17xi32>
    %cst_25 = arith.constant 0.000000e+00 : f32
    %70 = vector.broadcast %cst_25 : f32 to vector<17x17xf32>
    %71 = arith.select %69, %59, %70 : vector<17x17xi1>, vector<17x17xf32>
    %cst_26 = arith.constant dense<0.000000e+00> : vector<17xf32>
    %72 = vector.multi_reduction <add>, %71, %cst_26 [0] : vector<17x17xf32> to vector<17xf32>
    %73 = vector.shape_cast %72 : vector<17xf32> to vector<1x17xf32>
    %74 = vector.extract_strided_slice %59 {offsets = [16, 0], sizes = [1, 17], strides = [1, 1]} : vector<17x17xf32> to vector<1x17xf32>
    %75 = vector.extract_strided_slice %74 {offsets = [0, 0], sizes = [1, 8], strides = [1, 1]} : vector<1x17xf32> to vector<1x8xf32>
    %76 = vector.extract_strided_slice %74 {offsets = [0, 8], sizes = [1, 8], strides = [1, 1]} : vector<1x17xf32> to vector<1x8xf32>
    %77 = vector.extract_strided_slice %66 {offsets = [0, 0], sizes = [1, 8], strides = [1, 1]} : vector<1x17xf32> to vector<1x8xf32>
    %78 = vector.extract_strided_slice %66 {offsets = [0, 8], sizes = [1, 8], strides = [1, 1]} : vector<1x17xf32> to vector<1x8xf32>
    %79 = vector.extract_strided_slice %73 {offsets = [0, 0], sizes = [1, 8], strides = [1, 1]} : vector<1x17xf32> to vector<1x8xf32>
    %cst_27 = arith.constant 0.000000e+00 : f32
    %80 = vector.broadcast %cst_27 : f32 to vector<3x8xf32>
    %81 = tpu.concatenate %75, %76, %77, %78, %79, %80 in 0 : vector<1x8xf32>, vector<1x8xf32>, vector<1x8xf32>, vector<1x8xf32>, vector<1x8xf32>, vector<3x8xf32> -> vector<8x8xf32>
    %c0_28 = arith.constant 0 : index
    %c0_29 = arith.constant 0 : index
    %c0_30 = arith.constant 0 : index
    %82 = vector.load %arg7[%c0_28, %c0_29, %c0_30] : memref<1x8x8xf32, #tpu.memory_space<vmem>>, vector<1x8x8xf32>
    %83 = vector.shape_cast %82 : vector<1x8x8xf32> to vector<8x8xf32>
    %84 = vector.shape_cast %81 : vector<8x8xf32> to vector<1x8x8xf32>
    tpu.vector_store %arg7[%c0_28, %c0_29, %c0_30], %84 {strides = array<i32>} : memref<1x8x8xf32, #tpu.memory_space<vmem>>, vector<1x8x8xf32>,
    return
  }
  func.func @transform_0(%arg0: i32) -> (i32, i32, i32) {
    %c0_i32 = arith.constant 0 : i32
    %c0_i32_0 = arith.constant 0 : i32
    %c0_i32_1 = arith.constant 0 : i32
    return %arg0, %c0_i32, %c0_i32_0 : i32, i32, i32
  }
  func.func @transform_1(%arg0: i32) -> (i32, i32, i32) {
    %c0_i32 = arith.constant 0 : i32
    %c0_i32_0 = arith.constant 0 : i32
    %c0_i32_1 = arith.constant 0 : i32
    %c0_i32_2 = arith.constant 0 : i32
    return %c0_i32, %c0_i32_0, %c0_i32_1 : i32, i32, i32
  }
  func.func @transform_2(%arg0: i32) -> (i32, i32) {
    %c0_i32 = arith.constant 0 : i32
    %c0_i32_0 = arith.constant 0 : i32
    %c0_i32_1 = arith.constant 0 : i32
    return %c0_i32, %c0_i32_0 : i32, i32
  }
  func.func @transform_3(%arg0: i32) -> (i32, i32) {
    %c0_i32 = arith.constant 0 : i32
    %c0_i32_0 = arith.constant 0 : i32
    %c0_i32_1 = arith.constant 0 : i32
    return %c0_i32, %c0_i32_0 : i32, i32
  }
  func.func @transform_4(%arg0: i32) -> (i32, i32) {
    %c0_i32 = arith.constant 0 : i32
    %c0_i32_0 = arith.constant 0 : i32
    %c0_i32_1 = arith.constant 0 : i32
    return %c0_i32, %c0_i32_0 : i32, i32
  }
  func.func @transform_5(%arg0: i32) -> (i32, i32, i32) {
    %c0_i32 = arith.constant 0 : i32
    %c0_i32_0 = arith.constant 0 : i32
    %c0_i32_1 = arith.constant 0 : i32
    return %arg0, %c0_i32, %c0_i32_0 : i32, i32, i32
  }
  func.func @transform_6(%arg0: i32) -> (i32, i32, i32) {
    %c0_i32 = arith.constant 0 : i32
    %c0_i32_0 = arith.constant 0 : i32
    %c0_i32_1 = arith.constant 0 : i32
    return %arg0, %c0_i32, %c0_i32_0 : i32, i32, i32
  }
}

</mosaic_0001>

<llo_original>
// kernel: tpu_custom_call.1
$region0: #{tpu_custom_call.1}
  #allocation0 [shape = 'u32[]', space=smem, size = 0x4, offset = 0x4, fixed_abs, tag = 'smem constant byte address 0x4 - core index']
  #allocation1 [shape = 'u32[72,128]{1,0:T(1,128)}', space=vmem, size = 0x9000, scoped, tag = 'internal scratch']
  %s0 = inlined_call_operand.hbm [shape: f32[2,8,256], index: 0, kind: input, shape index: {}]
  %s1 = inlined_call_operand.hbm [shape: bf16[3,16,24], index: 1, kind: input, shape index: {}]
  %s2 = inlined_call_operand.vmem [shape: f32[16,1], index: 2, kind: input, shape index: {}]
  %s3 = inlined_call_operand.vmem [shape: f32[4,8], index: 3, kind: input, shape index: {}]
  %s4 = inlined_call_operand.vmem [shape: f32[2,256], index: 4, kind: input, shape index: {}]
  %s5 = inlined_call_operand.hbm [shape: bf16[2,16,256], index: 5, kind: output, shape index: {0}]
  %s6 = inlined_call_operand.hbm [shape: f32[2,8,8], index: 6, kind: output, shape index: {1}]
  %7 = xla_tuple %s5, %s6
  %s8 = sld [smem:[#allocation0]]
  $region69: #{tpu_custom_call.1} parent=0
    _
  %s10 = ssub.s32 1, %s8
  %s11 = scalar_select 0, %s10, %s8
  $region1: #{tpu_custom_call.1} parent=0
    #allocation2 [shape = 'u8[16384]{0}', space=vmem, size = 0x4000, scoped, tag = 'input window, operand 0']
    #allocation3 [shape = 's32[2]{0}', space=sflag, size = 0x8, scoped, tag = 'scoped memory for tpu_custom_call.1']
    #allocation4 [shape = 's32[2]{0}', space=sflag, size = 0x8, scoped, tag = 'scoped memory for tpu_custom_call.1']
    #allocation5 [shape = 'u8[12288]{0}', space=vmem, size = 0x3000, scoped, tag = 'input window, operand 1, single buffered']
    #allocation6 [shape = 's32[1]{0}', space=sflag, size = 0x4, scoped, tag = 'scoped memory for tpu_custom_call.1']
    #allocation7 [shape = 'u8[16384]{0}', space=vmem, size = 0x4000, scoped, tag = 'output window, operand 0']
    #allocation8 [shape = 'u8[8192]{0}', space=vmem, size = 0x2000, scoped, tag = 'output window, operand 1']
    #allocation9 [shape = 's32[2]{0}', space=sflag, size = 0x8, scoped, tag = 'scoped memory for tpu_custom_call.1']
    %12 = vsyncpa [#allocation3], 0
    %s13 = scalar_lea.sflag [#allocation3], 1
    %14 = vsyncpa %s13, 0
    %15 = vsyncpa [#allocation6], 0
    %16 = vsyncpa [#allocation4], 0
    %s17 = scalar_lea.sflag [#allocation4], 1
    %18 = vsyncpa %s17, 0
    %19 = vsyncpa [#allocation9], 0
    %s20 = scalar_lea.sflag [#allocation9], 1
    %21 = vsyncpa %s20, 0
    loop: start=0, step=1, limit=4
    $region2: #{tpu_custom_call.1} parent=1 // loop_pre_header
      _
    $region3: #{tpu_custom_call.1} parent=1 // loop_header
      %s23 = sphi 0, %s27
      %p24 = scmp.ge.s32.totalorder %s23, 4
      %s33 = sphi 0, %s35
      %s36 = sphi 0, %s33
      %s37 = sphi 0, %s36
      %s53 = sphi 0, %s37
      %s57 = sphi 0, %s57
      %s59 = sphi 0, %s57
      %s60 = sphi 0, %s59
      %s74 = sphi 0, %s60
      %s78 = sphi 0, %s78
      %s80 = sphi 0, %s78
      %s81 = sphi 0, %s80
      %s95 = sphi 0, %s81
      %s99 = sphi 0, %s99
      %s101 = sphi 0, %s99
      %s102 = sphi 0, %s101
      %s116 = sphi 0, %s102
      %s120 = sphi 0, %s120
      %s122 = sphi 0, %s120
      %s123 = sphi 0, %s122
      %s137 = sphi 0, %s123
      %s143 = sphi 0, %s145
      %s146 = sphi 0, %s143
      %s147 = sphi 0, %s146
      %s163 = sphi 0, %s147
      %s169 = sphi 0, %s171
      %s172 = sphi 0, %s169
      %s173 = sphi 0, %s172
      %s189 = sphi 0, %s173
    $region4: #{tpu_custom_call.1} parent=1 // loop_header_branch
      %26 = sbr.rel (%p24) target = $region8
    $region5: #{tpu_custom_call.1} parent=1 // loop_body
      %s28 = ssub.s32 %s23, 1
      %s29 = ssub.s32 %s23, 2
      %s30 = sadd.s32 %s23, 1
      %s31 = ssub.s32 %s23, %s30
      %p32 = scmp.eq.s32.totalorder %s31, 0
      %s34 = sadd.s32 %s33, 1
      %s35 = scalar_select %p32, %s33, %s34
      %p38 = pneg %p32
      %p39 = scmp.eq.s32.totalorder %s23, 1
      %p40 = por %p38, %p39
      %p41 = scmp.ne.s32.totalorder %s33, %s36
      %p42 = scmp.eq.s32.totalorder %s23, 0
      %p43 = por %p41, %p42
      %p44 = scmp.ne.s32.totalorder %s33, %s36
      %p45 = scmp.eq.s32.totalorder %s28, 1
      %p46 = por %p44, %p45
      %p47 = scmp.ne.s32.totalorder %s36, %s37
      %p48 = scmp.eq.s32.totalorder %s28, 0
      %p49 = por %p47, %p48
      %p50 = scmp.ne.s32.totalorder %s36, %s37
      %p51 = scmp.eq.s32.totalorder %s29, 1
      %p52 = por %p50, %p51
      %p54 = scmp.ne.s32.totalorder %s37, %s53
      %p55 = scmp.eq.s32.totalorder %s29, 0
      %p56 = por %p54, %p55
      %s58 = sadd.s32 %s57, 1
      %p61 = scmp.eq.s32.totalorder %s23, 1
      %p62 = scmp.ne.s32.totalorder %s57, %s59
      %p63 = scmp.eq.s32.totalorder %s23, 0
      %p64 = por %p62, %p63
      %p65 = scmp.ne.s32.totalorder %s57, %s59
      %p66 = scmp.eq.s32.totalorder %s28, 1
      %p67 = por %p65, %p66
      %p68 = scmp.ne.s32.totalorder %s59, %s60
      %p69 = scmp.eq.s32.totalorder %s28, 0
      %p70 = por %p68, %p69
      %p71 = scmp.ne.s32.totalorder %s59, %s60
      %p72 = scmp.eq.s32.totalorder %s29, 1
      %p73 = por %p71, %p72
      %p75 = scmp.ne.s32.totalorder %s60, %s74
      %p76 = scmp.eq.s32.totalorder %s29, 0
      %p77 = por %p75, %p76
      %s79 = sadd.s32 %s78, 1
      %p82 = scmp.eq.s32.totalorder %s23, 1
      %p83 = scmp.ne.s32.totalorder %s78, %s80
      %p84 = scmp.eq.s32.totalorder %s23, 0
      %p85 = por %p83, %p84
      %p86 = scmp.ne.s32.totalorder %s78, %s80
      %p87 = scmp.eq.s32.totalorder %s28, 1
      %p88 = por %p86, %p87
      %p89 = scmp.ne.s32.totalorder %s80, %s81
      %p90 = scmp.eq.s32.totalorder %s28, 0
      %p91 = por %p89, %p90
      %p92 = scmp.ne.s32.totalorder %s80, %s81
      %p93 = scmp.eq.s32.totalorder %s29, 1
      %p94 = por %p92, %p93
      %p96 = scmp.ne.s32.totalorder %s81, %s95
      %p97 = scmp.eq.s32.totalorder %s29, 0
      %p98 = por %p96, %p97
      %s100 = sadd.s32 %s99, 1
      %p103 = scmp.eq.s32.totalorder %s23, 1
      %p104 = scmp.ne.s32.totalorder %s99, %s101
      %p105 = scmp.eq.s32.totalorder %s23, 0
      %p106 = por %p104, %p105
      %p107 = scmp.ne.s32.totalorder %s99, %s101
      %p108 = scmp.eq.s32.totalorder %s28, 1
      %p109 = por %p107, %p108
      %p110 = scmp.ne.s32.totalorder %s101, %s102
      %p111 = scmp.eq.s32.totalorder %s28, 0
      %p112 = por %p110, %p111
      %p113 = scmp.ne.s32.totalorder %s101, %s102
      %p114 = scmp.eq.s32.totalorder %s29, 1
      %p115 = por %p113, %p114
      %p117 = scmp.ne.s32.totalorder %s102, %s116
      %p118 = scmp.eq.s32.totalorder %s29, 0
      %p119 = por %p117, %p118
      %s121 = sadd.s32 %s120, 1
      %p124 = scmp.eq.s32.totalorder %s23, 1
      %p125 = scmp.ne.s32.totalorder %s120, %s122
      %p126 = scmp.eq.s32.totalorder %s23, 0
      %p127 = por %p125, %p126
      %p128 = scmp.ne.s32.totalorder %s120, %s122
      %p129 = scmp.eq.s32.totalorder %s28, 1
      %p130 = por %p128, %p129
      %p131 = scmp.ne.s32.totalorder %s122, %s123
      %p132 = scmp.eq.s32.totalorder %s28, 0
      %p133 = por %p131, %p132
      %p134 = scmp.ne.s32.totalorder %s122, %s123
      %p135 = scmp.eq.s32.totalorder %s29, 1
      %p136 = por %p134, %p135
      %p138 = scmp.ne.s32.totalorder %s123, %s137
      %p139 = scmp.eq.s32.totalorder %s29, 0
      %p140 = por %p138, %p139
      %s141 = ssub.s32 %s23, %s30
      %p142 = scmp.eq.s32.totalorder %s141, 0
      %s144 = sadd.s32 %s143, 1
      %s145 = scalar_select %p142, %s143, %s144
      %p148 = pneg %p142
      %p149 = scmp.eq.s32.totalorder %s23, 1
      %p150 = por %p148, %p149
      %p151 = scmp.ne.s32.totalorder %s143, %s146
      %p152 = scmp.eq.s32.totalorder %s23, 0
      %p153 = por %p151, %p152
      %p154 = scmp.ne.s32.totalorder %s143, %s146
      %p155 = scmp.eq.s32.totalorder %s28, 1
      %p156 = por %p154, %p155
      %p157 = scmp.ne.s32.totalorder %s146, %s147
      %p158 = scmp.eq.s32.totalorder %s28, 0
      %p159 = por %p157, %p158
      %p160 = scmp.ne.s32.totalorder %s146, %s147
      %p161 = scmp.eq.s32.totalorder %s29, 1
      %p162 = por %p160, %p161
      %p164 = scmp.ne.s32.totalorder %s147, %s163
      %p165 = scmp.eq.s32.totalorder %s29, 0
      %p166 = por %p164, %p165
      %s167 = ssub.s32 %s23, %s30
      %p168 = scmp.eq.s32.totalorder %s167, 0
      %s170 = sadd.s32 %s169, 1
      %s171 = scalar_select %p168, %s169, %s170
      %p174 = pneg %p168
      %p175 = scmp.eq.s32.totalorder %s23, 1
      %p176 = por %p174, %p175
      %p177 = scmp.ne.s32.totalorder %s169, %s172
      %p178 = scmp.eq.s32.totalorder %s23, 0
      %p179 = por %p177, %p178
      %p180 = scmp.ne.s32.totalorder %s169, %s172
      %p181 = scmp.eq.s32.totalorder %s28, 1
      %p182 = por %p180, %p181
      %p183 = scmp.ne.s32.totalorder %s172, %s173
      %p184 = scmp.eq.s32.totalorder %s28, 0
      %p185 = por %p183, %p184
      %p186 = scmp.ne.s32.totalorder %s172, %s173
      %p187 = scmp.eq.s32.totalorder %s29, 1
      %p188 = por %p186, %p187
      %p190 = scmp.ne.s32.totalorder %s173, %s189
      %p191 = scmp.eq.s32.totalorder %s29, 0
      %p192 = por %p190, %p191
      %p193 = scmp.le.s32.totalorder 1, %s23
      %p194 = scmp.lt.s32.totalorder %s23, 3
      %p195 = pnand %p193, %p194
      %p196 = pneg %p195
      // Predicated region
      $region9: #{tpu_custom_call.1} parent=5 // pred_check
        _
      $region10: #{tpu_custom_call.1} parent=5 // pred_check_branch
        %198 = sbr.rel (%p195) target = $region12
      $region11: #{tpu_custom_call.1} parent=5 // pred_region
        %s199 = ssub.s32 %s23, 1
        // Predicated region
        $region13: #{tpu_custom_call.1} parent=11 // pred_check
          %p200 = pneg %p70
        $region14: #{tpu_custom_call.1} parent=11 // pred_check_branch
          %202 = sbr.rel (%p200) target = $region16
        $region15: #{tpu_custom_call.1} parent=11 // pred_region
          %204 = vsyncadd [#allocation6], 0
          %s205 = sshll.u32 %s1, 4
          %s206 = int_to_ptr.hbm [resolvable:$true] %s205
          %s207 = sshll.u32 [#allocation5], 4
          %s208 = int_to_ptr.vmem [resolvable:$true] %s207
          %213 = dma.hbm_to_vmem [thread:$0]  %s206, 384, %s208, [#allocation6], 64, 64, 4
        $region16: #{tpu_custom_call.1} parent=11 // pred_fallthru
          _
        // Predicated region
        $region17: #{tpu_custom_call.1} parent=11 // pred_check
          %p214 = pneg %p91
        $region18: #{tpu_custom_call.1} parent=11 // pred_check_branch
          %216 = sbr.rel (%p214) target = $region20
        $region19: #{tpu_custom_call.1} parent=11 // pred_region
          _
        $region20: #{tpu_custom_call.1} parent=11 // pred_fallthru
          _
        // Predicated region
        $region21: #{tpu_custom_call.1} parent=11 // pred_check
          %p217 = pneg %p112
        $region22: #{tpu_custom_call.1} parent=11 // pred_check_branch
          %219 = sbr.rel (%p217) target = $region24
        $region23: #{tpu_custom_call.1} parent=11 // pred_region
          _
        $region24: #{tpu_custom_call.1} parent=11 // pred_fallthru
          _
        // Predicated region
        $region25: #{tpu_custom_call.1} parent=11 // pred_check
          %p220 = pneg %p133
        $region26: #{tpu_custom_call.1} parent=11 // pred_check_branch
          %222 = sbr.rel (%p220) target = $region28
        $region27: #{tpu_custom_call.1} parent=11 // pred_region
          _
        $region28: #{tpu_custom_call.1} parent=11 // pred_fallthru
          _
      $region12: #{tpu_custom_call.1} parent=5 // pred_fallthru
        _
      %p223 = scmp.lt.s32.totalorder %s23, 2
      // Predicated region
      $region29: #{tpu_custom_call.1} parent=5 // pred_check
        %p224 = pneg %p223
      $region30: #{tpu_custom_call.1} parent=5 // pred_check_branch
        %226 = sbr.rel (%p224) target = $region32
      $region31: #{tpu_custom_call.1} parent=5 // pred_region
        // Predicated region
        $region33: #{tpu_custom_call.1} parent=31 // pred_check
          %p227 = pneg %p43
        $region34: #{tpu_custom_call.1} parent=31 // pred_check_branch
          %229 = sbr.rel (%p227) target = $region36
        $region35: #{tpu_custom_call.1} parent=31 // pred_region
          %s230 = sand.u32 %s33, 1
          %s231 = scalar_lea.sflag [#allocation3], %s230
          %s232 = sand.u32 %s33, 1
          %s233 = smul.addr %s232, 16
          %s234 = scalar_lea.vmem [#allocation2], %s233
          %236 = vsyncadd %s231, 0
          %s237 = smul.addr %s23, 2
          %s238 = smul.addr %s237, 8
          %s239 = scalar_lea.hbm %s0, %s238
          %s241 = sshll.u32 %s239, 4
          %s242 = int_to_ptr.hbm [resolvable:$true] %s241
          %s243 = sshll.u32 %s234, 4
          %s244 = int_to_ptr.vmem [resolvable:$true] %s243
          %246 = dma.hbm_to_vmem [thread:$0]  %s242, 256, %s244, %s231
        $region36: #{tpu_custom_call.1} parent=31 // pred_fallthru
          _
      $region32: #{tpu_custom_call.1} parent=5 // pred_fallthru
        _
      %p247 = scmp.le.s32.totalorder 1, %s23
      %p248 = scmp.lt.s32.totalorder %s23, 3
      %p249 = pnand %p247, %p248
      %p250 = pneg %p249
      // Predicated region
      $region37: #{tpu_custom_call.1} parent=5 // pred_check
        _
      $region38: #{tpu_custom_call.1} parent=5 // pred_check_branch
        %252 = sbr.rel (%p249) target = $region40
      $region39: #{tpu_custom_call.1} parent=5 // pred_region
        %s253 = ssub.s32 %s23, 1
        %s254 = sand.u32 %s36, 1
        %s255 = scalar_lea.sflag [#allocation3], %s254
        %s256 = sand.u32 %s36, 1
        %s257 = smul.addr %s256, 16
        %s258 = scalar_lea.vmem [#allocation2], %s257
        // Predicated region
        $region41: #{tpu_custom_call.1} parent=39 // pred_check
          %p259 = pneg %p49
        $region42: #{tpu_custom_call.1} parent=39 // pred_check_branch
          %261 = sbr.rel (%p259) target = $region44
        $region43: #{tpu_custom_call.1} parent=39 // pred_region
          %263 = dma.done %s255, 256
        $region44: #{tpu_custom_call.1} parent=39 // pred_fallthru
          _
        // Predicated region
        $region45: #{tpu_custom_call.1} parent=39 // pred_check
          %p264 = pneg %p70
        $region46: #{tpu_custom_call.1} parent=39 // pred_check_branch
          %266 = sbr.rel (%p264) target = $region48
        $region47: #{tpu_custom_call.1} parent=39 // pred_region
          %268 = dma.done [#allocation6], 384
        $region48: #{tpu_custom_call.1} parent=39 // pred_fallthru
          _
        %s269 = sand.u32 %s36, 1
        %s270 = scalar_lea.sflag [#allocation3], %s269
        %s271 = sand.u32 %s36, 1
        %s272 = smul.addr %s271, 16
        %s273 = scalar_lea.vmem [#allocation2], %s272
        %p274 = pneg %p49
        %p275 = pneg %p46
        %p276 = pneg %p70
        %p277 = pneg %p67
        %p278 = pneg %p91
        %p279 = pneg %p88
        %p280 = pneg %p112
        %p281 = pneg %p109
        %p282 = pneg %p133
        %p283 = pneg %p130
        %p284 = pneg %p159
        %p285 = pneg %p156
        %s286 = sand.u32 %s146, 1
        %s287 = scalar_lea.sflag [#allocation4], %s286
        %s288 = sand.u32 %s146, 1
        %s289 = smul.addr %s288, 16
        %s290 = scalar_lea.vmem [#allocation7], %s289
        %p291 = pneg %p185
        %p292 = pneg %p182
        %s293 = sand.u32 %s172, 1
        %s294 = scalar_lea.sflag [#allocation9], %s293
        %s295 = sand.u32 %s172, 1
        %s296 = smul.addr %s295, 8
        %s297 = scalar_lea.vmem [#allocation8], %s296
        %v300 = vld [vmem:[%s258] sm:$0xff]
        %v301 = vld [vmem:[%s258 + $0x8] sm:$0xff]
        %304 = vrot.lane.b32.xlu0 %v300, 17
        %v305 = vpop.permute.xlu0 %304
        %306 = vrot.lane.b32.xlu0 %v301, 17
        %v307 = vpop.permute.xlu0 %306
        %vm308 = vcmask 138240
        %v309 = vsel %vm308, %v305, %v307
        %v313 = vsel %vm308, 0.0, %v305
        %v314 = vsel %vm308, %v307, 0.0
        %v315 = vld [vmem:[%s4] ss:$2 sm:$0x3]
        %s316 = scalar_lea.vmem %s4, 1
        %v317 = vld [vmem:[%s316] ss:$2 sm:$0x3]
        %v319 = vperm.slane %v315, 0
        %v320 = vperm.slane %v315, 1
        %v323 = vmul.f32 %v313, %v319
        %v324 = vmul.f32 %v309, %v320
        %v325 = vpack.c.bf16 %v324, %v323
        %v326 = vpack.c.bf16 %v309, %v313
        %v327 = vpack.c.bf16 %v314, %v314
        %v329 = vperm.slane %v317, 0
        %v330 = vperm.slane %v317, 1
        %331 = vrot.lane.b32.xlu0 %v329, 2
        %v332 = vpop.permute.xlu0 %331
        %333 = vrot.lane.b32.xlu0 %v330, 2
        %v334 = vpop.permute.xlu0 %333
        %vm335 = vcmask 15360
        %v336 = vsel %vm335, %v332, %v334
        %v340 = vmul.f32 %v313, %v332
        %v341 = vmul.f32 %v309, %v336
        %v342 = vmul.f32 %v314, %v334
        %v343 = vpack.c.bf16 %v341, %v340
        %v344 = vpack.c.bf16 %v342, %v342
        %v346 = vunpack.c.l.b16 %v325
        %v347 = vunpack.c.h.b16 %v325
        %v348 = vpack.c.b16 %v346, %v346
        %v349 = vpack.c.b16 %v347, %v347
        %v352 = vunpack.c.l.b16 %v326
        %v353 = vunpack.c.h.b16 %v326
        %v354 = vunpack.c.l.b16 %v327
        %v355 = vpack.c.b16 %v352, %v352
        %v356 = vpack.c.b16 %v353, %v353
        %v357 = vpack.c.b16 %v354, %v354
        %358 = vrot.lane.b32.xlu0 %v355, 127
        %v359 = vpop.permute.xlu0 %358
        %360 = vrot.lane.b32.xlu0 %v356, 127
        %v361 = vpop.permute.xlu0 %360
        %362 = vrot.lane.b32.xlu0 %v357, 127
        %v363 = vpop.permute.xlu0 %362
        %vm364 = vcmask 1039360
        %v365 = vsel %vm364, %v359, %v361
        %v366 = vsel %vm364, %v361, %v363
        %v369 = vunpack.c.l.b16 %v343
        %v370 = vunpack.c.h.b16 %v343
        %v371 = vunpack.c.l.b16 %v344
        %v372 = vpack.c.b16 %v369, %v369
        %v373 = vpack.c.b16 %v370, %v370
        %v374 = vpack.c.b16 %v371, %v371
        %375 = vrot.lane.b32.xlu0 %v372, 126
        %v376 = vpop.permute.xlu0 %375
        %377 = vrot.lane.b32.xlu0 %v373, 126
        %v378 = vpop.permute.xlu0 %377
        %379 = vrot.lane.b32.xlu0 %v374, 126
        %v380 = vpop.permute.xlu0 %379
        %vm381 = vcmask 1031168
        %v382 = vsel %vm381, %v376, %v378
        %v383 = vsel %vm381, %v378, %v380
        %vm384 = vcmask 1043456
        %v387 = vsel %vm384, %v348, %v365
        %v391 = vsel %vm384, %v349, %v366
        %v393 = vld [vmem:[#allocation5] sm:$0xf]
        %v394 = vld [vmem:[#allocation5 + $0x4] sm:$0xf]
        %395 = vrot.lane.b32.xlu0 %v319, 16
        %v396 = vpop.permute.xlu0 %395
        %397 = vrot.lane.b32.xlu0 %v320, 16
        %v398 = vpop.permute.xlu0 %397
        %vm399 = vcmask 130048
        %v400 = vsel %vm399, %v396, %v398
        %v404 = vmul.f32 %v313, %v396
        %v405 = vmul.f32 %v309, %v400
        %v406 = vmul.f32 %v314, %v398
        %v407 = vpack.c.bf16 %v405, %v404
        %v408 = vpack.c.bf16 %v406, %v406
        %409 = vrot.lane.b32.xlu0 %v329, 18
        %v410 = vpop.permute.xlu0 %409
        %411 = vrot.lane.b32.xlu0 %v330, 18
        %v412 = vpop.permute.xlu0 %411
        %vm413 = vcmask 146432
        %v414 = vsel %vm413, %v410, %v412
        %v418 = vmul.f32 %v313, %v410
        %v419 = vmul.f32 %v309, %v414
        %v420 = vmul.f32 %v314, %v412
        %v421 = vpack.c.bf16 %v419, %v418
        %v422 = vpack.c.bf16 %v420, %v420
        %v425 = vunpack.c.l.b16 %v407
        %v426 = vunpack.c.h.b16 %v407
        %v427 = vunpack.c.l.b16 %v408
        %v428 = vpack.c.b16 %v425, %v425
        %v429 = vpack.c.b16 %v426, %v426
        %v430 = vpack.c.b16 %v427, %v427
        %v433 = vunpack.c.l.b16 %v421
        %v434 = vunpack.c.h.b16 %v421
        %v435 = vunpack.c.l.b16 %v422
        %v436 = vpack.c.b16 %v433, %v433
        %v437 = vpack.c.b16 %v434, %v434
        %v438 = vpack.c.b16 %v435, %v435
        %439 = vrot.lane.b32.xlu0 %v436, 126
        %v440 = vpop.permute.xlu0 %439
        %441 = vrot.lane.b32.xlu0 %v437, 126
        %v442 = vpop.permute.xlu0 %441
        %443 = vrot.lane.b32.xlu0 %v438, 126
        %v444 = vpop.permute.xlu0 %443
        %v445 = vsel %vm381, %v440, %v442
        %v446 = vsel %vm381, %v442, %v444
        %v448 = vsel %vm384, %v428, %v365
        %v450 = vsel %vm384, %v429, %v366
        %v453 = vsel %vm384, %v430, %v363
        %s454 = scalar_lea.vmem [#allocation5], 8
        %v455 = vld [vmem:[%s454] sm:$0xf]
        %v456 = vld [vmem:[%s454 + $0x4] sm:$0xf]
        %v459 = vunpack.c.l.b16 %v455
        %v460 = vunpack.c.l.b16 %v456
        %v461 = vpack.c.b16 %v460, %v459
        %465 = vrot.lane.b32.xlu0 %v448, 112
        %v466 = vpop.permute.xlu0 %465
        %467 = vrot.lane.b32.xlu0 %v450, 112
        %v468 = vpop.permute.xlu0 %467
        %469 = vrot.lane.b32.xlu0 %v453, 112
        %v470 = vpop.permute.xlu0 %469
        %471 = vrot.lane.b32.xlu0 %v445, 112
        %v472 = vpop.permute.xlu0 %471
        %473 = vrot.lane.b32.xlu0 %v446, 112
        %v474 = vpop.permute.xlu0 %473
        %475 = vrot.lane.b32.xlu0 %v444, 112
        %v476 = vpop.permute.xlu0 %475
        %vm477 = vcmask 916480
        %v478 = vsel %vm477, %v466, %v468
        %v479 = vsel %vm477, %v468, %v470
        %v480 = vsel %vm477, %v472, %v474
        %v481 = vsel %vm477, %v474, %v476
        %vm484 = vcmask 195584
        %v486 = vsel %vm484, %v461, 0
        %v489 = vsel %vm384, %v480, 0
        %v492 = vsel %vm384, %v481, 0
        %494 = vmatpush.bf16.msra.mxu0 0
        %495 = vmatpush.bf16.msra.mxu0 0
        %496 = vmatpush.bf16.msra.mxu0 0
        %497 = vmatpush.bf16.msra.mxu0 0
        %498 = vmatpush.bf16.msra.mxu0 0
        %499 = vmatpush.bf16.msra.mxu0 0
        %500 = vmatpush.bf16.msra.mxu0 %v489
        %501 = vmatpush.bf16.msra.mxu0 %v478
        %502 = vmatmul.bf16.gmra.mxu0 %v486
        %v503 = vpop.f32.mrf.mxu0
        %v504 = vadd.f32 0.0, %v503
        %v505 = vpop.f32.mrf.mxu0
        %v506 = vadd.f32 0.0, %v505
        %507 = vdwg.mxu0
        %508 = vmatpush.bf16.msra.mxu0 0
        %509 = vmatpush.bf16.msra.mxu0 0
        %510 = vmatpush.bf16.msra.mxu0 0
        %511 = vmatpush.bf16.msra.mxu0 0
        %512 = vmatpush.bf16.msra.mxu0 0
        %513 = vmatpush.bf16.msra.mxu0 0
        %514 = vmatpush.bf16.msra.mxu0 %v492
        %515 = vmatpush.bf16.msra.mxu0 %v479
        %516 = vmatmul.bf16.gmra.mxu0 %v486
        %v517 = vpop.f32.mrf.mxu0
        %v518 = vadd.f32 0.0, %v517
        %v519 = vpop.f32.mrf.mxu0
        %v520 = vadd.f32 0.0, %v519
        %521 = vdwg.mxu0
        %v524 = vunpack.c.l.b16 %v393
        %v525 = vunpack.c.l.b16 %v394
        %v526 = vpack.c.b16 %v525, %v524
        %v528 = vsel %vm484, %v526, 0
        %v531 = vsel %vm384, %v382, 0
        %v534 = vsel %vm384, %v383, 0
        %536 = vmatpush.bf16.msra.mxu0 0
        %537 = vmatpush.bf16.msra.mxu0 0
        %538 = vmatpush.bf16.msra.mxu0 0
        %539 = vmatpush.bf16.msra.mxu0 0
        %540 = vmatpush.bf16.msra.mxu0 0
        %541 = vmatpush.bf16.msra.mxu0 0
        %542 = vmatpush.bf16.msra.mxu0 %v531
        %543 = vmatpush.bf16.msra.mxu0 %v387
        %544 = vmatmul.bf16.gmra.mxu0 %v528
        %v545 = vpop.f32.mrf.mxu0
        %v546 = vadd.f32 %v504, %v545
        %v547 = vpop.f32.mrf.mxu0
        %v548 = vadd.f32 %v506, %v547
        %549 = vdwg.mxu0
        %550 = vmatpush.bf16.msra.mxu0 0
        %551 = vmatpush.bf16.msra.mxu0 0
        %552 = vmatpush.bf16.msra.mxu0 0
        %553 = vmatpush.bf16.msra.mxu0 0
        %554 = vmatpush.bf16.msra.mxu0 0
        %555 = vmatpush.bf16.msra.mxu0 0
        %556 = vmatpush.bf16.msra.mxu0 %v534
        %557 = vmatpush.bf16.msra.mxu0 %v391
        %558 = vmatmul.bf16.gmra.mxu0 %v528
        %v559 = vpop.f32.mrf.mxu0
        %v560 = vadd.f32 %v518, %v559
        %v561 = vpop.f32.mrf.mxu0
        %v562 = vadd.f32 %v520, %v561
        %563 = vdwg.mxu0
        %564 = vrot.lane.b32.xlu0 %v319, 32
        %v565 = vpop.permute.xlu0 %564
        %566 = vrot.lane.b32.xlu0 %v320, 32
        %v567 = vpop.permute.xlu0 %566
        %vm568 = vcmask 261120
        %v569 = vsel %vm568, %v565, %v567
        %v573 = vmul.f32 %v313, %v565
        %v574 = vmul.f32 %v309, %v569
        %v575 = vmul.f32 %v314, %v567
        %v576 = vpack.c.bf16 %v574, %v573
        %v577 = vpack.c.bf16 %v575, %v575
        %578 = vrot.lane.b32.xlu0 %v329, 34
        %v579 = vpop.permute.xlu0 %578
        %580 = vrot.lane.b32.xlu0 %v330, 34
        %v581 = vpop.permute.xlu0 %580
        %vm582 = vcmask 277504
        %v583 = vsel %vm582, %v579, %v581
        %v587 = vmul.f32 %v313, %v579
        %v588 = vmul.f32 %v309, %v583
        %v589 = vmul.f32 %v314, %v581
        %v590 = vpack.c.bf16 %v588, %v587
        %v591 = vpack.c.bf16 %v589, %v589
        %v594 = vunpack.c.l.b16 %v576
        %v595 = vunpack.c.h.b16 %v576
        %v596 = vunpack.c.l.b16 %v577
        %v597 = vpack.c.b16 %v594, %v594
        %v598 = vpack.c.b16 %v595, %v595
        %v599 = vpack.c.b16 %v596, %v596
        %v602 = vunpack.c.l.b16 %v590
        %v603 = vunpack.c.h.b16 %v590
        %v604 = vunpack.c.l.b16 %v591
        %v605 = vpack.c.b16 %v602, %v602
        %v606 = vpack.c.b16 %v603, %v603
        %v607 = vpack.c.b16 %v604, %v604
        %608 = vrot.lane.b32.xlu0 %v605, 126
        %v609 = vpop.permute.xlu0 %608
        %610 = vrot.lane.b32.xlu0 %v606, 126
        %v611 = vpop.permute.xlu0 %610
        %612 = vrot.lane.b32.xlu0 %v607, 126
        %v613 = vpop.permute.xlu0 %612
        %v614 = vsel %vm381, %v609, %v611
        %v615 = vsel %vm381, %v611, %v613
        %v617 = vsel %vm384, %v597, %v365
        %v619 = vsel %vm384, %v598, %v366
        %v621 = vsel %vm384, %v599, %v363
        %s622 = scalar_lea.vmem [#allocation5], 16
        %v623 = vld [vmem:[%s622] sm:$0xf]
        %v624 = vld [vmem:[%s622 + $0x4] sm:$0xf]
        %v627 = vunpack.c.l.b16 %v623
        %v628 = vunpack.c.l.b16 %v624
        %v629 = vpack.c.b16 %v628, %v627
        %633 = vrot.lane.b32.xlu0 %v617, 96
        %v634 = vpop.permute.xlu0 %633
        %635 = vrot.lane.b32.xlu0 %v619, 96
        %v636 = vpop.permute.xlu0 %635
        %637 = vrot.lane.b32.xlu0 %v621, 96
        %v638 = vpop.permute.xlu0 %637
        %639 = vrot.lane.b32.xlu0 %v614, 96
        %v640 = vpop.permute.xlu0 %639
        %641 = vrot.lane.b32.xlu0 %v615, 96
        %v642 = vpop.permute.xlu0 %641
        %643 = vrot.lane.b32.xlu0 %v613, 96
        %v644 = vpop.permute.xlu0 %643
        %vm645 = vcmask 785408
        %v646 = vsel %vm645, %v634, %v636
        %v647 = vsel %vm645, %v636, %v638
        %v648 = vsel %vm645, %v640, %v642
        %v649 = vsel %vm645, %v642, %v644
        %v653 = vsel %vm484, %v629, 0
        %v656 = vsel %vm384, %v648, 0
        %v659 = vsel %vm384, %v649, 0
        %661 = vmatpush.bf16.msra.mxu0 0
        %662 = vmatpush.bf16.msra.mxu0 0
        %663 = vmatpush.bf16.msra.mxu0 0
        %664 = vmatpush.bf16.msra.mxu0 0
        %665 = vmatpush.bf16.msra.mxu0 0
        %666 = vmatpush.bf16.msra.mxu0 0
        %667 = vmatpush.bf16.msra.mxu0 %v656
        %668 = vmatpush.bf16.msra.mxu0 %v646
        %669 = vmatmul.bf16.gmra.mxu0 %v653
        %v670 = vpop.f32.mrf.mxu0
        %v671 = vadd.f32 0.0, %v670
        %v672 = vpop.f32.mrf.mxu0
        %v673 = vadd.f32 0.0, %v672
        %674 = vdwg.mxu0
        %675 = vmatpush.bf16.msra.mxu0 0
        %676 = vmatpush.bf16.msra.mxu0 0
        %677 = vmatpush.bf16.msra.mxu0 0
        %678 = vmatpush.bf16.msra.mxu0 0
        %679 = vmatpush.bf16.msra.mxu0 0
        %680 = vmatpush.bf16.msra.mxu0 0
        %681 = vmatpush.bf16.msra.mxu0 %v659
        %682 = vmatpush.bf16.msra.mxu0 %v647
        %683 = vmatmul.bf16.gmra.mxu0 %v653
        %v684 = vpop.f32.mrf.mxu0
        %v685 = vadd.f32 0.0, %v684
        %v686 = vpop.f32.mrf.mxu0
        %v687 = vadd.f32 0.0, %v686
        %688 = vdwg.mxu0
        %v689 = vadd.f32 %v546, %v671
        %v690 = vadd.f32 %v560, %v685
        %v691 = vadd.f32 %v548, %v673
        %v692 = vadd.f32 %v562, %v687
        %v693 = vld [vmem:[%s2] sm:$0xff]
        %v694 = vld [vmem:[%s2 + $0x8] sm:$0xff]
        %696 = vset.pattern.permute.xlu0 0
        %697 = vperm.xlu0 %696, %v693
        %v698 = vpop.permute.xlu0 %697
        %701 = vset.pattern.permute.xlu0 0
        %702 = vperm.xlu0 %701, %v694
        %v703 = vpop.permute.xlu0 %702
        %v705 = vadd.f32 %v689, %v698
        %v706 = vadd.f32 %v690, %v698
        %v707 = vadd.f32 %v691, %v703
        %v708 = vadd.f32 %v692, %v703
        %v709 = vpack.c.bf16 %v706, %v705
        %v710 = vpack.c.bf16 %v708, %v707
        %711 = vst [vmem:[%s290] sm:$0xff] %v709
        %712 = vst [vmem:[%s290 + $0x8] sm:$0xff] %v710
        %v715 = vunpack.c.l.b16 %v709
        %v716 = vunpack.c.h.b16 %v709
        %v717 = vunpack.c.l.b16 %v710
        %v718 = vunpack.c.h.b16 %v710
        %v719 = vpack.c.b16 %v717, %v715
        %v720 = vpack.c.b16 %v718, %v716
        %723 = vmatpush.bf16.xpose.msra.mxu0 0
        %724 = vmatpush.bf16.xpose.msra.mxu0 0
        %725 = vmatpush.bf16.xpose.msra.mxu0 0
        %726 = vmatpush.bf16.xpose.msra.mxu0 0
        %727 = vmatpush.bf16.xpose.msra.mxu0 0
        %728 = vmatpush.bf16.xpose.msra.mxu0 0
        %729 = vmatpush.bf16.xpose.msra.mxu0 1065369472
        %730 = vmatpush.bf16.xpose.msra.mxu0 %v719
        %731 = vmatmul.bf16.gmra.mxu0 %v719
        %v732 = vpop.f32.mrf.mxu0
        %v733 = vadd.f32 0.0, %v732
        %v734 = vpop.f32.mrf.mxu0
        %v735 = vadd.f32 0.0, %v734
        %736 = vmatmul.bf16.gmra.mxu0 1065369472
        %v737 = vpop.f32.mrf.mxu0
        %v738 = vadd.f32 0.0, %v737
        %v739 = vpop.f32.mrf.mxu0
        %740 = vdwg.mxu0
        %741 = vmatpush.bf16.xpose.msra.mxu0 0
        %742 = vmatpush.bf16.xpose.msra.mxu0 0
        %743 = vmatpush.bf16.xpose.msra.mxu0 0
        %744 = vmatpush.bf16.xpose.msra.mxu0 0
        %745 = vmatpush.bf16.xpose.msra.mxu0 0
        %746 = vmatpush.bf16.xpose.msra.mxu0 0
        %747 = vmatpush.bf16.xpose.msra.mxu0 1065369472
        %748 = vmatpush.bf16.xpose.msra.mxu0 %v720
        %749 = vmatmul.bf16.gmra.mxu0 %v720
        %v750 = vpop.f32.mrf.mxu0
        %v751 = vadd.f32 %v733, %v750
        %v752 = vpop.f32.mrf.mxu0
        %v753 = vadd.f32 %v735, %v752
        %754 = vmatmul.bf16.gmra.mxu0 1065369472
        %v755 = vpop.f32.mrf.mxu0
        %v756 = vadd.f32 %v738, %v755
        %v757 = vpop.f32.mrf.mxu0
        %758 = vdwg.mxu0
        %v759 = vlaneseq
        %v760 = vshrl.u32 %v759, 7
        %v761 = vadd.s32 %v760, 8
        %v762 = vadd.s32 %v760, 16
        %v763 = vlaneseq
        %v764 = vand.u32 %v763, 127
        %vm765 = vcmp.eq.s32.totalorder %v760, %v764
        %vm766 = vcmp.eq.s32.totalorder %v761, %v764
        %vm767 = vcmp.eq.s32.totalorder %v762, %v764
        %v768 = vsel %vm765, %v751, 0.0
        %v769 = vsel %vm766, %v753, 0.0
        %v770 = vsel %vm767, %v756, 0.0
        %v771 = vsel %vm308, %v768, 0.0
        %v772 = vsel %vm308, %v769, 0.0
        %v773 = vadd.f32 %v771, %v772
        %vm774 = vcmask 131072
        %v775 = vsel %vm774, %v770, 0.0
        %v776 = vadd.f32 %v773, %v775
        %v777 = vrot.slane %v776, 4
        %v778 = vadd.f32 %v776, %v777
        %v779 = vrot.slane %v778, 2
        %v780 = vadd.f32 %v778, %v779
        %v781 = vrot.slane %v780, 1
        %v782 = vadd.f32 %v780, %v781
        %v783 = vadd.s32 %v764, 8
        %vm784 = vcmp.eq.s32.totalorder %v760, %v783
        %vm785 = vcmp.eq.s32.totalorder %v761, %v783
        %vm786 = vcmp.eq.s32.totalorder %v762, %v783
        %v787 = vsel %vm784, %v751, 0.0
        %v788 = vsel %vm785, %v753, 0.0
        %v789 = vsel %vm786, %v756, 0.0
        %v790 = vsel %vm308, %v787, 0.0
        %v791 = vsel %vm308, %v788, 0.0
        %v792 = vadd.f32 %v790, %v791
        %v793 = vsel %vm774, %v789, 0.0
        %v794 = vadd.f32 %v792, %v793
        %v795 = vrot.slane %v794, 4
        %v796 = vadd.f32 %v794, %v795
        %v797 = vrot.slane %v796, 2
        %v798 = vadd.f32 %v796, %v797
        %v799 = vrot.slane %v798, 1
        %v800 = vadd.f32 %v798, %v799
        %v802 = vrot.slane %v756, 7
        %803 = vrot.lane.b32.xlu0 %v802, 120
        %v804 = vpop.permute.xlu0 %803
        %807 = vrot.lane.b32.xlu0 %v782, 120
        %v808 = vpop.permute.xlu0 %807
        %vm810 = vcmask 1040384
        %v811 = vsel %vm810, %v756, %v804
        %vm812 = vcmask 1041408
        %v813 = vsel %vm812, %v811, %v782
        %vm814 = vcmask 1042432
        %v815 = vsel %vm814, %v813, %v808
        %v816 = vsel %vm384, %v815, %v800
        %vm817 = vcmask 1044480
        %v818 = vsel %vm817, %v816, 0.0
        %vm819 = vcmask 64512
        %820 = vst.msk [vmem:[%s297] sm:$0xff] %vm819, %v818
        %s821 = sand.u32 %s146, 1
        %s822 = scalar_lea.sflag [#allocation4], %s821
        %s823 = sand.u32 %s146, 1
        %s824 = smul.addr %s823, 16
        %s825 = scalar_lea.vmem [#allocation7], %s824
        %s826 = sand.u32 %s172, 1
        %s827 = scalar_lea.sflag [#allocation9], %s826
        %s828 = sand.u32 %s172, 1
        %s829 = smul.addr %s828, 8
        %s830 = scalar_lea.vmem [#allocation8], %s829
        // Predicated region
        $region49: #{tpu_custom_call.1} parent=39 // pred_check
          %p831 = pneg %p156
        $region50: #{tpu_custom_call.1} parent=39 // pred_check_branch
          %833 = sbr.rel (%p831) target = $region52
        $region51: #{tpu_custom_call.1} parent=39 // pred_region
          %835 = vsyncadd %s822, 0
          %s836 = smul.addr %s28, 4
          %s837 = smul.addr %s836, 4
          %s838 = scalar_lea.hbm %s5, %s837
          %s839 = sshll.u32 %s825, 4
          %s840 = int_to_ptr.vmem [resolvable:$true] %s839
          %s841 = sshll.u32 %s838, 4
          %s842 = int_to_ptr.hbm [resolvable:$true] %s841
          %847 = dma.vmem_to_hbm [thread:$0]  %s840, 256, %s842, %s822, 128, 128, 8
        $region52: #{tpu_custom_call.1} parent=39 // pred_fallthru
          _
        // Predicated region
        $region53: #{tpu_custom_call.1} parent=39 // pred_check
          %p848 = pneg %p182
        $region54: #{tpu_custom_call.1} parent=39 // pred_check_branch
          %850 = sbr.rel (%p848) target = $region56
        $region55: #{tpu_custom_call.1} parent=39 // pred_region
          %852 = vsyncadd %s827, 0
          %s853 = smul.addr %s28, 8
          %s854 = scalar_lea.hbm %s6, %s853
          %s856 = sshll.u32 %s830, 4
          %s857 = int_to_ptr.vmem [resolvable:$true] %s856
          %s858 = sshll.u32 %s854, 4
          %s859 = int_to_ptr.hbm [resolvable:$true] %s858
          %861 = dma.vmem_to_hbm [thread:$0]  %s857, 128, %s859, %s827
        $region56: #{tpu_custom_call.1} parent=39 // pred_fallthru
          _
      $region40: #{tpu_custom_call.1} parent=5 // pred_fallthru
        _
      %p862 = scmp.le.s32.totalorder 2, %s23
      // Predicated region
      $region57: #{tpu_custom_call.1} parent=5 // pred_check
        %p863 = pneg %p862
      $region58: #{tpu_custom_call.1} parent=5 // pred_check_branch
        %865 = sbr.rel (%p863) target = $region60
      $region59: #{tpu_custom_call.1} parent=5 // pred_region
        %s866 = ssub.s32 %s23, 2
        // Predicated region
        $region61: #{tpu_custom_call.1} parent=59 // pred_check
          %p867 = pneg %p162
        $region62: #{tpu_custom_call.1} parent=59 // pred_check_branch
          %869 = sbr.rel (%p867) target = $region64
        $region63: #{tpu_custom_call.1} parent=59 // pred_region
          %s870 = sand.u32 %s147, 1
          %s871 = scalar_lea.sflag [#allocation4], %s870
          %s872 = sand.u32 %s147, 1
          %s873 = smul.addr %s872, 16
          %s874 = scalar_lea.vmem [#allocation7], %s873
          %876 = dma.done %s871, 256
        $region64: #{tpu_custom_call.1} parent=59 // pred_fallthru
          _
        // Predicated region
        $region65: #{tpu_custom_call.1} parent=59 // pred_check
          %p877 = pneg %p188
        $region66: #{tpu_custom_call.1} parent=59 // pred_check_branch
          %879 = sbr.rel (%p877) target = $region68
        $region67: #{tpu_custom_call.1} parent=59 // pred_region
          %s880 = sand.u32 %s173, 1
          %s881 = scalar_lea.sflag [#allocation9], %s880
          %s882 = sand.u32 %s173, 1
          %s883 = smul.addr %s882, 8
          %s884 = scalar_lea.vmem [#allocation8], %s883
          %886 = dma.done %s881, 128
        $region68: #{tpu_custom_call.1} parent=59 // pred_fallthru
          _
      $region60: #{tpu_custom_call.1} parent=5 // pred_fallthru
        _
    $region6: #{tpu_custom_call.1} parent=1 // loop_footer
      %s27 = sadd.s32 1, %s23
    $region7: #{tpu_custom_call.1} parent=1 // loop_footer_branch
      %22 = sbr.rel target = $region3
    $region8: #{tpu_custom_call.1} parent=1 // loop_exit
      _
    %887 = vsyncpa [#allocation3], 1
    %s888 = scalar_lea.sflag [#allocation3], 1
    %889 = vsyncpa %s888, 1
    %890 = vsyncpa [#allocation6], 1
    %891 = vsyncpa [#allocation4], 1
    %s892 = scalar_lea.sflag [#allocation4], 1
    %893 = vsyncpa %s892, 1
    %894 = vsyncpa [#allocation9], 1
    %s895 = scalar_lea.sflag [#allocation9], 1
    %896 = vsyncpa %s895, 1

</llo_original>
